<compile_context>
chip_gen: v6e
topology: v6e:2x2x1
jax: 0.10.0
libtpu: 0.0.40
codegen_flags: <defaults>
</compile_context>

<pallas_src>
import functools
import math

import jax
import jax.numpy as jnp
from jax.experimental import pallas as pl
from jax.experimental.pallas import tpu as pltpu

_LANE = 128      # in-kernel lane-dense width for logits / softmax
_HIDDEN = 128
_K_PAD = 8       # obs_dim padded to one f32 sublane tile
_OUT_PAD = 8     # HBM output width (action_dim padded to 8)
_MAX_TM = 2048   # ~8.5 MB VMEM/step; fits every generation's scoped default
_SPLIT_B = 512   # for B >= this, force >=2 grid steps (v7x has 2 TensorCores)


def _round_up(x, m):
    return ((x + m - 1) // m) * m


# ------------------------------- kernel ------------------------------------

def _policy_kernel(x_ref, w1_ref, b1_ref, w2_ref, b2_ref, w3_ref, b3_ref,
                   out_ref, *, obs_dim, layer1_on_mxu):
    x = x_ref[...]                                   # (tm, K_PAD) f32
    b1 = b1_ref[...]                                 # (1, H) f32

    # ---- layer 1 ----
    if layer1_on_mxu:
        # v6e/v7x: the 256x256 MXU has large slack at H=128, so a K=8 pass is
        # essentially free and offloads ~half of the per-row VALU work.
        h1 = jnp.dot(x, w1_ref[...], preferred_element_type=jnp.float32) + b1
    else:
        # v5e: keep layer 1 on the VPU; the 128x128 MXUs are the critical
        # unit there and a padded-K pass would lengthen the MXU path.
        w1 = w1_ref[...]
        h1 = b1
        for k in range(obs_dim):                     # static unroll (obs_dim ~ 3)
            h1 = h1 + x[:, k:k + 1] * w1[k:k + 1, :]
    h1 = jnp.maximum(h1, 0.0)                        # (tm, H) f32

    # ---- layers 2/3 on the MXU: bf16 operands, f32 accumulation ----
    h2 = jnp.dot(h1.astype(jnp.bfloat16), w2_ref[...],
                 preferred_element_type=jnp.float32) + b2_ref[...]
    h2 = jnp.maximum(h2, 0.0)
    logits = jnp.dot(h2.astype(jnp.bfloat16), w3_ref[...],
                     preferred_element_type=jnp.float32) + b3_ref[...]

    # ---- numerically stable softmax over the lane-dense 128-wide axis.
    #      Padded lanes carry bias -1e30 (f32 throughout) -> exp underflows to
    #      exactly 0, so the denominator only sees the real action lanes. ----
    m = jnp.max(logits, axis=-1, keepdims=True)
    e = jnp.exp(logits - m)
    denom = jnp.sum(e, axis=-1, keepdims=True)
    probs = e * pl.reciprocal(denom, approx=False)   # exact: keeps sum==1 tight

    # Narrow writeback: only the first _OUT_PAD lanes go back to HBM.
    out_ref[...] = probs[:, :out_ref.shape[1]]


# ------------------------------- wrapper ------------------------------------

def _default_layer1_on_mxu():
    try:
        kind = jax.devices()[0].device_kind.lower()
    except Exception:  # pragma: no cover
        return False
    # MXU placement only where the 256x256 MXU has slack (v6e / v7x).
    return any(tag in kind for tag in ("v6", "v7", "7x"))


def _choose_tiling(B, tm):
    tm = max(8, min(int(tm), _MAX_TM))
    n_tiles = max(1, -(-B // tm))
    if B >= _SPLIT_B and n_tiles < 2:
        n_tiles = 2            # keep both v7x TensorCores busy (harmless elsewhere)
    tm_eff = _round_up(-(-B // n_tiles), 8)   # balanced ragged tiles
    return tm_eff, n_tiles


def prepare_params(params):
    """One-time pad / cast of the weights (hoisted out of the per-call path)."""
    obs_dim, hidden = params["w1"].shape
    action_dim = params["w3"].shape[1]
    assert hidden == _HIDDEN and obs_dim <= _K_PAD and action_dim <= _OUT_PAD
    w1p = jnp.zeros((_K_PAD, hidden), jnp.float32).at[:obs_dim, :].set(params["w1"])
    w3p = (jnp.zeros((hidden, _LANE), jnp.float32)
           .at[:, :action_dim].set(params["w3"])).astype(jnp.bfloat16)
    b3p = jnp.full((1, _LANE), -1e30, jnp.float32).at[:, :action_dim].set(params["b3"])
    return {
        "obs_dim": int(obs_dim),
        "action_dim": int(action_dim),
        "w1": w1p,                                   # (K_PAD, H)  f32
        "b1": params["b1"].astype(jnp.float32),      # (1, H)      f32
        "w2": params["w2"].astype(jnp.bfloat16),     # (H, H)      bf16
        "b2": params["b2"].astype(jnp.float32),      # (1, H)      f32
        "w3": w3p,                                   # (H, LANE)   bf16
        "b3": b3p,                                   # (1, LANE)   f32 (keep f32!)
    }


def cart_entropy_policy_forward(x, prepared, tm=1024, layer1_on_mxu=None):
    """x: (B, obs_dim) f32; prepared: dict from prepare_params. -> (B, action_dim)."""
    if layer1_on_mxu is None:
        layer1_on_mxu = _default_layer1_on_mxu()
    B, obs_dim = x.shape
    assert obs_dim == prepared["obs_dim"]
    action_dim = prepared["action_dim"]
    H = _HIDDEN

    tm_eff, n_tiles = _choose_tiling(B, tm)
    padded_B = n_tiles * tm_eff
    # One fused pad: batch rows to padded_B and obs lanes to K_PAD.
    xp = jnp.pad(x, ((0, padded_B - B), (0, _K_PAD - obs_dim)))

    flops = 2 * padded_B * (_K_PAD * H + H * H + H * _LANE)
    bytes_accessed = (padded_B * (_K_PAD + _OUT_PAD) * 4
                      + (_K_PAD * H + 2 * H + _LANE) * 4
                      + (H * H + H * _LANE) * 2)
    cost = pl.CostEstimate(flops=flops,
                           transcendentals=padded_B * _LANE,
                           bytes_accessed=bytes_accessed)

    kernel = functools.partial(_policy_kernel, obs_dim=obs_dim,
                               layer1_on_mxu=bool(layer1_on_mxu))

    out = pl.pallas_call(
        kernel,
        out_shape=jax.ShapeDtypeStruct((padded_B, _OUT_PAD), jnp.float32),
        grid_spec=pltpu.PrefetchScalarGridSpec(
            num_scalar_prefetch=0,
            grid=(n_tiles,),
            in_specs=[
                pl.BlockSpec((tm_eff, _K_PAD), lambda i: (i, 0)),   # x: pipelined
                pl.BlockSpec((_K_PAD, H), lambda i: (0, 0)),        # w1 (K padded)
                pl.BlockSpec((1, H), lambda i: (0, 0)),             # b1
                pl.BlockSpec((H, H), lambda i: (0, 0)),             # w2 (bf16)
                pl.BlockSpec((1, H), lambda i: (0, 0)),             # b2
                pl.BlockSpec((H, _LANE), lambda i: (0, 0)),         # w3 padded (bf16)
                pl.BlockSpec((1, _LANE), lambda i: (0, 0)),         # b3 padded (f32)
            ],
            out_specs=pl.BlockSpec((tm_eff, _OUT_PAD), lambda i: (i, 0)),
        ),
        compiler_params=pltpu.CompilerParams(
            dimension_semantics=("parallel",)),
        cost_estimate=cost,
    )(xp, prepared["w1"], prepared["b1"], prepared["w2"], prepared["b2"],
      prepared["w3"], prepared["b3"])

    return out[:B, :action_dim]


# ------------------------- init (matches PyTorch) ---------------------------

def _xavier_uniform(key, fan_in, fan_out):
    # torch.nn.init.xavier_uniform_ (gain=1): U(-a, a), a = sqrt(6/(fan_in+fan_out))
    a = math.sqrt(6.0 / (fan_in + fan_out))
    return jax.random.uniform(key, (fan_in, fan_out), jnp.float32, minval=-a, maxval=a)


def _linear_bias(key, fan_in, fan_out):
    # PyTorch nn.Linear default bias init: U(-1/sqrt(fan_in), 1/sqrt(fan_in))
    bound = 1.0 / math.sqrt(fan_in)
    return jax.random.uniform(key, (1, fan_out), jnp.float32, minval=-bound, maxval=bound)


def init_params(key, obs_dim, action_dim, hidden=128):
    k = jax.random.split(key, 6)
    return {
        "w1": _xavier_uniform(k[0], obs_dim, hidden),
        "b1": _linear_bias(k[1], obs_dim, hidden),
        "w2": _xavier_uniform(k[2], hidden, hidden),
        "b2": _linear_bias(k[3], hidden, hidden),
        "w3": _xavier_uniform(k[4], hidden, action_dim),
        "b3": _linear_bias(k[5], hidden, action_dim),
    }


# ------------------------------ references ----------------------------------

def _reference_forward_f32(x, p):
    h1 = jnp.maximum(x @ p["w1"] + p["b1"], 0.0)
    h2 = jnp.maximum(h1 @ p["w2"] + p["b2"], 0.0)
    logits = h2 @ p["w3"] + p["b3"]
    return jax.nn.softmax(logits, axis=1)


def _reference_forward_bf16(x, p):
    # Mirrors the kernel's numerics: layer 1 in f32, layers 2/3 with bf16
    # operands and f32 accumulation.
    h1 = jnp.maximum(x @ p["w1"] + p["b1"], 0.0)
    h2 = jnp.maximum(
        jnp.dot(h1.astype(jnp.bfloat16), p["w2"].astype(jnp.bfloat16),
                preferred_element_type=jnp.float32) + p["b2"], 0.0)
    logits = jnp.dot(h2.astype(jnp.bfloat16), p["w3"].astype(jnp.bfloat16),
                     preferred_element_type=jnp.float32) + p["b3"]
    return jax.nn.softmax(logits, axis=1)


# --------------------------------- demo --------------------------------------

if __name__ == "__main__":
    key = jax.random.PRNGKey(0)
    k_params, k_x1, k_x2 = jax.random.split(key, 3)

    # Pendulum-like: obs_dim=3 (cos theta, sin theta, thetadot), action_dim=3
    obs_dim, action_dim = 3, 3
    params = init_params(k_params, obs_dim, action_dim)
    prepared = prepare_params(params)   # one-time pad/cast, hoisted out of forward

    # Small batch (single tile) — matches the original get_probs-style usage.
    x_small = jax.random.normal(k_x1, (8, obs_dim), jnp.float32)
    probs_small = jax.block_until_ready(cart_entropy_policy_forward(x_small, prepared))
    assert probs_small.shape == (8, action_dim)
    assert jnp.allclose(probs_small, _reference_forward_bf16(x_small, params),
                        atol=5e-3, rtol=0)
    assert jnp.allclose(probs_small, _reference_forward_f32(x_small, params),
                        atol=3e-2, rtol=0)
    assert jnp.allclose(jnp.sum(probs_small, axis=1), jnp.ones((8,)), atol=1e-5)

    # Larger, ragged batch: >=2 balanced grid steps (v7x megacore), resident
    # weights, pipelined x/out tiles, narrow (8-lane) output writeback.
    x_large = jax.random.normal(k_x2, (1000, obs_dim), jnp.float32)
    probs_large = jax.block_until_ready(
        cart_entropy_policy_forward(x_large, prepared, tm=1024))
    assert probs_large.shape == (1000, action_dim)
    assert jnp.allclose(probs_large, _reference_forward_bf16(x_large, params),
                        atol=5e-3, rtol=0)
    assert jnp.allclose(probs_large, _reference_forward_f32(x_large, params),
                        atol=3e-2, rtol=0)
    assert jnp.allclose(jnp.sum(probs_large, axis=1), jnp.ones((1000,)), atol=1e-5)

    print("KERNEL_OK")
</pallas_src>

<mosaic_0001>
module attributes {stable_mosaic.version = 11 : i64} {
  func.func @_policy_kernel(%arg0: i32, %arg1: memref<8x8xf32, #tpu.memory_space<vmem>>, %arg2: memref<8x128xf32, #tpu.memory_space<vmem>>, %arg3: memref<1x128xf32, #tpu.memory_space<vmem>>, %arg4: memref<128x128xbf16, #tpu.memory_space<vmem>>, %arg5: memref<1x128xf32, #tpu.memory_space<vmem>>, %arg6: memref<128x128xbf16, #tpu.memory_space<vmem>>, %arg7: memref<1x128xf32, #tpu.memory_space<vmem>>, %arg8: memref<8x8xf32, #tpu.memory_space<vmem>>) attributes {dimension_semantics = [#tpu.dimension_semantics<parallel>], iteration_bounds = array<i64: 1>, scalar_prefetch = 0 : i64, scratch_operands = 0 : i64, tpu.core_type = #tpu.core_type<tc>, window_params = [{transform_indices = @transform_0, window_bounds = array<i64: 8, 8>}, {pipeline_mode = #tpu.pipeline_mode<synchronous>, transform_indices = @transform_1, window_bounds = array<i64: 8, 128>}, {pipeline_mode = #tpu.pipeline_mode<synchronous>, transform_indices = @transform_2, window_bounds = array<i64: 1, 128>}, {pipeline_mode = #tpu.pipeline_mode<synchronous>, transform_indices = @transform_3, window_bounds = array<i64: 128, 128>}, {pipeline_mode = #tpu.pipeline_mode<synchronous>, transform_indices = @transform_4, window_bounds = array<i64: 1, 128>}, {pipeline_mode = #tpu.pipeline_mode<synchronous>, transform_indices = @transform_5, window_bounds = array<i64: 128, 128>}, {pipeline_mode = #tpu.pipeline_mode<synchronous>, transform_indices = @transform_6, window_bounds = array<i64: 1, 128>}, {transform_indices = @transform_7, window_bounds = array<i64: 8, 8>}]} {
    %c0 = arith.constant 0 : index
    %c0_0 = arith.constant 0 : index
    %0 = vector.load %arg1[%c0, %c0_0] : memref<8x8xf32, #tpu.memory_space<vmem>>, vector<8x8xf32>
    %c0_1 = arith.constant 0 : index
    %c0_2 = arith.constant 0 : index
    %1 = vector.load %arg3[%c0_1, %c0_2] : memref<1x128xf32, #tpu.memory_space<vmem>>, vector<1x128xf32>
    %c0_3 = arith.constant 0 : index
    %c0_4 = arith.constant 0 : index
    %2 = vector.load %arg2[%c0_3, %c0_4] : memref<8x128xf32, #tpu.memory_space<vmem>>, vector<8x128xf32>
    %3 = vector.extract_strided_slice %0 {offsets = [0, 0], sizes = [8, 1], strides = [1, 1]} : vector<8x8xf32> to vector<8x1xf32>
    %4 = vector.extract_strided_slice %2 {offsets = [0, 0], sizes = [1, 128], strides = [1, 1]} : vector<8x128xf32> to vector<1x128xf32>
    %5 = vector.broadcast %3 : vector<8x1xf32> to vector<8x128xf32>
    %6 = vector.broadcast %4 : vector<1x128xf32> to vector<8x128xf32>
    %7 = arith.mulf %5, %6 : vector<8x128xf32>
    %8 = vector.broadcast %1 : vector<1x128xf32> to vector<8x128xf32>
    %9 = arith.addf %8, %7 : vector<8x128xf32>
    %10 = vector.extract_strided_slice %0 {offsets = [0, 1], sizes = [8, 1], strides = [1, 1]} : vector<8x8xf32> to vector<8x1xf32>
    %11 = vector.extract_strided_slice %2 {offsets = [1, 0], sizes = [1, 128], strides = [1, 1]} : vector<8x128xf32> to vector<1x128xf32>
    %12 = vector.broadcast %10 : vector<8x1xf32> to vector<8x128xf32>
    %13 = vector.broadcast %11 : vector<1x128xf32> to vector<8x128xf32>
    %14 = arith.mulf %12, %13 : vector<8x128xf32>
    %15 = arith.addf %9, %14 : vector<8x128xf32>
    %16 = vector.extract_strided_slice %0 {offsets = [0, 2], sizes = [8, 1], strides = [1, 1]} : vector<8x8xf32> to vector<8x1xf32>
    %17 = vector.extract_strided_slice %2 {offsets = [2, 0], sizes = [1, 128], strides = [1, 1]} : vector<8x128xf32> to vector<1x128xf32>
    %18 = vector.broadcast %16 : vector<8x1xf32> to vector<8x128xf32>
    %19 = vector.broadcast %17 : vector<1x128xf32> to vector<8x128xf32>
    %20 = arith.mulf %18, %19 : vector<8x128xf32>
    %21 = arith.addf %15, %20 : vector<8x128xf32>
    %cst = arith.constant 0.000000e+00 : f32
    %22 = vector.broadcast %cst : f32 to vector<8x128xf32>
    %23 = arith.maximumf %21, %22 : vector<8x128xf32>
    %24 = arith.truncf %23 : vector<8x128xf32> to vector<8x128xbf16>
    %c0_5 = arith.constant 0 : index
    %c0_6 = arith.constant 0 : index
    %25 = vector.load %arg4[%c0_5, %c0_6] : memref<128x128xbf16, #tpu.memory_space<vmem>>, vector<128x128xbf16>
    %cst_7 = arith.constant dense<0.000000e+00> : vector<8x128xf32>
    %26 = tpu.matmul %24, %25, %cst_7 {dimension_numbers = #tpu.dot_dimension_numbers<[1], [0], [0], [1], [0, 0, 1, 1], [], []>} : vector<8x128xbf16>, vector<128x128xbf16>, vector<8x128xf32> -> vector<8x128xf32>
    %c0_8 = arith.constant 0 : index
    %c0_9 = arith.constant 0 : index
    %27 = vector.load %arg5[%c0_8, %c0_9] : memref<1x128xf32, #tpu.memory_space<vmem>>, vector<1x128xf32>
    %28 = vector.broadcast %27 : vector<1x128xf32> to vector<8x128xf32>
    %29 = arith.addf %26, %28 : vector<8x128xf32>
    %cst_10 = arith.constant 0.000000e+00 : f32
    %30 = vector.broadcast %cst_10 : f32 to vector<8x128xf32>
    %31 = arith.maximumf %29, %30 : vector<8x128xf32>
    %32 = arith.truncf %31 : vector<8x128xf32> to vector<8x128xbf16>
    %c0_11 = arith.constant 0 : index
    %c0_12 = arith.constant 0 : index
    %33 = vector.load %arg6[%c0_11, %c0_12] : memref<128x128xbf16, #tpu.memory_space<vmem>>, vector<128x128xbf16>
    %cst_13 = arith.constant dense<0.000000e+00> : vector<8x128xf32>
    %34 = tpu.matmul %32, %33, %cst_13 {dimension_numbers = #tpu.dot_dimension_numbers<[1], [0], [0], [1], [0, 0, 1, 1], [], []>} : vector<8x128xbf16>, vector<128x128xbf16>, vector<8x128xf32> -> vector<8x128xf32>
    %c0_14 = arith.constant 0 : index
    %c0_15 = arith.constant 0 : index
    %35 = vector.load %arg7[%c0_14, %c0_15] : memref<1x128xf32, #tpu.memory_space<vmem>>, vector<1x128xf32>
    %36 = vector.broadcast %35 : vector<1x128xf32> to vector<8x128xf32>
    %37 = arith.addf %34, %36 : vector<8x128xf32>
    %cst_16 = arith.constant dense<0xFF800000> : vector<8xf32>
    %38 = vector.multi_reduction <maximumf>, %37, %cst_16 [1] : vector<8x128xf32> to vector<8xf32>
    %39 = vector.shape_cast %38 : vector<8xf32> to vector<8x1xf32>
    %40 = vector.broadcast %39 : vector<8x1xf32> to vector<8x128xf32>
    %41 = arith.subf %37, %40 : vector<8x128xf32>
    %42 = math.exp %41 : vector<8x128xf32>
    %cst_17 = arith.constant dense<0.000000e+00> : vector<8xf32>
    %43 = vector.multi_reduction <add>, %42, %cst_17 [1] : vector<8x128xf32> to vector<8xf32>
    %44 = vector.shape_cast %43 : vector<8xf32> to vector<8x1xf32>
    %45 = tpu.reciprocal %44 : vector<8x1xf32> -> vector<8x1xf32>
    %46 = vector.broadcast %45 : vector<8x1xf32> to vector<8x128xf32>
    %47 = arith.mulf %42, %46 : vector<8x128xf32>
    %48 = vector.extract_strided_slice %47 {offsets = [0, 0], sizes = [8, 8], strides = [1, 1]} : vector<8x128xf32> to vector<8x8xf32>
    %c0_18 = arith.constant 0 : index
    %c0_19 = arith.constant 0 : index
    %49 = vector.load %arg8[%c0_18, %c0_19] : memref<8x8xf32, #tpu.memory_space<vmem>>, vector<8x8xf32>
    tpu.vector_store %arg8[%c0_18, %c0_19], %48 {strides = array<i32>} : memref<8x8xf32, #tpu.memory_space<vmem>>, vector<8x8xf32>,
    return
  }
  func.func @transform_0(%arg0: i32) -> (i32, i32) {
    %c0_i32 = arith.constant 0 : i32
    %c0_i32_0 = arith.constant 0 : i32
    return %arg0, %c0_i32 : i32, i32
  }
  func.func @transform_1(%arg0: i32) -> (i32, i32) {
    %c0_i32 = arith.constant 0 : i32
    %c0_i32_0 = arith.constant 0 : i32
    %c0_i32_1 = arith.constant 0 : i32
    return %c0_i32, %c0_i32_0 : i32, i32
  }
  func.func @transform_2(%arg0: i32) -> (i32, i32) {
    %c0_i32 = arith.constant 0 : i32
    %c0_i32_0 = arith.constant 0 : i32
    %c0_i32_1 = arith.constant 0 : i32
    return %c0_i32, %c0_i32_0 : i32, i32
  }
  func.func @transform_3(%arg0: i32) -> (i32, i32) {
    %c0_i32 = arith.constant 0 : i32
    %c0_i32_0 = arith.constant 0 : i32
    %c0_i32_1 = arith.constant 0 : i32
    return %c0_i32, %c0_i32_0 : i32, i32
  }
  func.func @transform_4(%arg0: i32) -> (i32, i32) {
    %c0_i32 = arith.constant 0 : i32
    %c0_i32_0 = arith.constant 0 : i32
    %c0_i32_1 = arith.constant 0 : i32
    return %c0_i32, %c0_i32_0 : i32, i32
  }
  func.func @transform_5(%arg0: i32) -> (i32, i32) {
    %c0_i32 = arith.constant 0 : i32
    %c0_i32_0 = arith.constant 0 : i32
    %c0_i32_1 = arith.constant 0 : i32
    return %c0_i32, %c0_i32_0 : i32, i32
  }
  func.func @transform_6(%arg0: i32) -> (i32, i32) {
    %c0_i32 = arith.constant 0 : i32
    %c0_i32_0 = arith.constant 0 : i32
    %c0_i32_1 = arith.constant 0 : i32
    return %c0_i32, %c0_i32_0 : i32, i32
  }
  func.func @transform_7(%arg0: i32) -> (i32, i32) {
    %c0_i32 = arith.constant 0 : i32
    %c0_i32_0 = arith.constant 0 : i32
    return %arg0, %c0_i32 : i32, i32
  }
}

</mosaic_0001>

<llo_original>
// kernel: tpu_custom_call.1
$region0: #{tpu_custom_call.1}
  #allocation0 [shape = 'u32[]', space=smem, size = 0x4, offset = 0x4, fixed_abs, tag = 'smem constant byte address 0x4 - core index']
  #allocation1 [shape = 'u32[144,128]{1,0:T(1,128)}', space=vmem, size = 0x12000, scoped, tag = 'internal scratch']
  %s0 = inlined_call_operand.hbm [shape: f32[8,8], index: 0, kind: input, shape index: {}]
  %s1 = inlined_call_operand.hbm [shape: f32[8,128], index: 1, kind: input, shape index: {}]
  %s2 = inlined_call_operand.vmem [shape: f32[1,128], index: 2, kind: input, shape index: {}]
  %s3 = inlined_call_operand.hbm [shape: bf16[128,128], index: 3, kind: input, shape index: {}]
  %s4 = inlined_call_operand.vmem [shape: f32[1,128], index: 4, kind: input, shape index: {}]
  %s5 = inlined_call_operand.hbm [shape: bf16[128,128], index: 5, kind: input, shape index: {}]
  %s6 = inlined_call_operand.vmem [shape: f32[1,128], index: 6, kind: input, shape index: {}]
  %s7 = inlined_call_operand.hbm [shape: f32[8,8], index: 7, kind: output, shape index: {}]
  %s8 = sld [smem:[#allocation0]]
  $region54: #{tpu_custom_call.1} parent=0
    _
  %s10 = ssub.s32 1, %s8
  %s11 = scalar_select 0, %s10, %s8
  $region1: #{tpu_custom_call.1} parent=0
    #allocation2 [shape = 'u8[4096]{0}', space=vmem, size = 0x1000, scoped, tag = 'input window, operand 0, single buffered']
    #allocation3 [shape = 's32[1]{0}', space=sflag, size = 0x4, scoped, tag = 'scoped memory for tpu_custom_call.1']
    #allocation4 [shape = 's32[1]{0}', space=sflag, size = 0x4, scoped, tag = 'scoped memory for tpu_custom_call.1']
    #allocation5 [shape = 'u8[4096]{0}', space=vmem, size = 0x1000, scoped, tag = 'input window, operand 1, single buffered']
    #allocation6 [shape = 's32[1]{0}', space=sflag, size = 0x4, scoped, tag = 'scoped memory for tpu_custom_call.1']
    #allocation7 [shape = 'u8[32768]{0}', space=vmem, size = 0x8000, scoped, tag = 'input window, operand 3, single buffered']
    #allocation8 [shape = 'u8[32768]{0}', space=vmem, size = 0x8000, scoped, tag = 'input window, operand 5, single buffered']
    #allocation9 [shape = 's32[1]{0}', space=sflag, size = 0x4, scoped, tag = 'scoped memory for tpu_custom_call.1']
    #allocation10 [shape = 'u8[4096]{0}', space=vmem, size = 0x1000, scoped, tag = 'output window, operand 0, single buffered']
    %12 = vsyncpa [#allocation3], 0
    %13 = vsyncpa [#allocation6], 0
    %14 = vsyncpa [#allocation9], 0
    %15 = vsyncpa [#allocation4], 0
    // Predicated region
    $region2: #{tpu_custom_call.1} parent=1 // pred_check
      _
    $region3: #{tpu_custom_call.1} parent=1 // pred_check_branch
      %17 = sbr.rel (0) target = $region5
    $region4: #{tpu_custom_call.1} parent=1 // pred_region
      %s19 = ssub.s32 128, 128
      %20 = vsyncadd [#allocation3], %s19
      %s22 = sshll.u32 [#allocation2], 4
      %s23 = int_to_ptr.vmem [resolvable:$true] %s22
      %25 = dma.hbm_to_vmem [thread:$0]  %s0, 128, %s23, [#allocation3]
    $region5: #{tpu_custom_call.1} parent=1 // pred_fallthru
      _
    // Predicated region
    $region6: #{tpu_custom_call.1} parent=1 // pred_check
      _
    $region7: #{tpu_custom_call.1} parent=1 // pred_check_branch
      %27 = sbr.rel (0) target = $region9
    $region8: #{tpu_custom_call.1} parent=1 // pred_region
      %s29 = ssub.s32 128, 128
      %30 = vsyncadd [#allocation6], %s29
      %s32 = sshll.u32 [#allocation5], 4
      %s33 = int_to_ptr.vmem [resolvable:$true] %s32
      %35 = dma.hbm_to_vmem [thread:$0]  %s1, 128, %s33, [#allocation6]
    $region9: #{tpu_custom_call.1} parent=1 // pred_fallthru
      _
    // Predicated region
    $region10: #{tpu_custom_call.1} parent=1 // pred_check
      _
    $region11: #{tpu_custom_call.1} parent=1 // pred_check_branch
      %37 = sbr.rel (0) target = $region13
    $region12: #{tpu_custom_call.1} parent=1 // pred_region
      _
    $region13: #{tpu_custom_call.1} parent=1 // pred_fallthru
      _
    // Predicated region
    $region14: #{tpu_custom_call.1} parent=1 // pred_check
      _
    $region15: #{tpu_custom_call.1} parent=1 // pred_check_branch
      %39 = sbr.rel (0) target = $region17
    $region16: #{tpu_custom_call.1} parent=1 // pred_region
      %s41 = ssub.s32 1024, 1024
      %42 = vsyncadd [#allocation6], %s41
      %s43 = sshll.u32 [#allocation7], 4
      %s44 = int_to_ptr.vmem [resolvable:$true] %s43
      %49 = dma.hbm_to_vmem [thread:$0]  %s3, 1024, %s44, [#allocation6], 64, 64, 4
    $region17: #{tpu_custom_call.1} parent=1 // pred_fallthru
      _
    // Predicated region
    $region18: #{tpu_custom_call.1} parent=1 // pred_check
      _
    $region19: #{tpu_custom_call.1} parent=1 // pred_check_branch
      %51 = sbr.rel (0) target = $region21
    $region20: #{tpu_custom_call.1} parent=1 // pred_region
      _
    $region21: #{tpu_custom_call.1} parent=1 // pred_fallthru
      _
    // Predicated region
    $region22: #{tpu_custom_call.1} parent=1 // pred_check
      _
    $region23: #{tpu_custom_call.1} parent=1 // pred_check_branch
      %53 = sbr.rel (0) target = $region25
    $region24: #{tpu_custom_call.1} parent=1 // pred_region
      %s55 = ssub.s32 1024, 1024
      %56 = vsyncadd [#allocation9], %s55
      %s57 = sshll.u32 [#allocation8], 4
      %s58 = int_to_ptr.vmem [resolvable:$true] %s57
      %63 = dma.hbm_to_vmem [thread:$0]  %s5, 1024, %s58, [#allocation9], 64, 64, 4
    $region25: #{tpu_custom_call.1} parent=1 // pred_fallthru
      _
    // Predicated region
    $region26: #{tpu_custom_call.1} parent=1 // pred_check
      _
    $region27: #{tpu_custom_call.1} parent=1 // pred_check_branch
      %65 = sbr.rel (0) target = $region29
    $region28: #{tpu_custom_call.1} parent=1 // pred_region
      _
    $region29: #{tpu_custom_call.1} parent=1 // pred_fallthru
      _
    // Predicated region
    $region30: #{tpu_custom_call.1} parent=1 // pred_check
      _
    $region31: #{tpu_custom_call.1} parent=1 // pred_check_branch
      %67 = sbr.rel (0) target = $region33
    $region32: #{tpu_custom_call.1} parent=1 // pred_region
      %68 = dma.done [#allocation3], 128
    $region33: #{tpu_custom_call.1} parent=1 // pred_fallthru
      _
    // Predicated region
    $region34: #{tpu_custom_call.1} parent=1 // pred_check
      _
    $region35: #{tpu_custom_call.1} parent=1 // pred_check_branch
      %70 = sbr.rel (0) target = $region37
    $region36: #{tpu_custom_call.1} parent=1 // pred_region
      %71 = dma.done [#allocation6], 128
    $region37: #{tpu_custom_call.1} parent=1 // pred_fallthru
      _
    // Predicated region
    $region38: #{tpu_custom_call.1} parent=1 // pred_check
      _
    $region39: #{tpu_custom_call.1} parent=1 // pred_check_branch
      %73 = sbr.rel (0) target = $region41
    $region40: #{tpu_custom_call.1} parent=1 // pred_region
      %74 = dma.done [#allocation6], 1024
    $region41: #{tpu_custom_call.1} parent=1 // pred_fallthru
      _
    // Predicated region
    $region42: #{tpu_custom_call.1} parent=1 // pred_check
      _
    $region43: #{tpu_custom_call.1} parent=1 // pred_check_branch
      %76 = sbr.rel (0) target = $region45
    $region44: #{tpu_custom_call.1} parent=1 // pred_region
      %77 = dma.done [#allocation9], 1024
    $region45: #{tpu_custom_call.1} parent=1 // pred_fallthru
      _
    %v79 = vld [vmem:[#allocation2] sm:$0xff]
    %v80 = vld [vmem:[%s2] sm:$0x1]
    %v81 = vld [vmem:[#allocation5] sm:$0xff]
    %83 = vset.pattern.permute.xlu0 0
    %84 = vperm.xlu0 %83, %v79
    %v85 = vpop.permute.xlu0 %84
    %v87 = vlaneseq
    %v88 = vshrl.u32 %v87, 7
    %v89 = vsub.s32 0, %v88
    %v90 = vrot.slane %v81, %v89
    %v91 = vmul.f32 %v85, %v90
    %v93 = vlaneseq
    %v94 = vshrl.u32 %v93, 7
    %v95 = vsub.s32 0, %v94
    %v96 = vrot.slane %v80, %v95
    %v98 = vadd.f32 %v96, %v91
    %99 = vset.pattern.permute.xlu0 1
    %100 = vperm.xlu0 %99, %v79
    %v101 = vpop.permute.xlu0 %100
    %v103 = vlaneseq
    %v104 = vshrl.u32 %v103, 7
    %v105 = vsub.s32 1, %v104
    %v106 = vrot.slane %v81, %v105
    %v107 = vmul.f32 %v101, %v106
    %v108 = vadd.f32 %v98, %v107
    %109 = vset.pattern.permute.xlu0 2
    %110 = vperm.xlu0 %109, %v79
    %v111 = vpop.permute.xlu0 %110
    %v113 = vlaneseq
    %v114 = vshrl.u32 %v113, 7
    %v115 = vsub.s32 2, %v114
    %v116 = vrot.slane %v81, %v115
    %v117 = vmul.f32 %v111, %v116
    %v118 = vadd.f32 %v108, %v117
    %v119 = vmax.f32 %v118, 0.0
    %v120 = vpack.c.bf16 %v119, %v119
    %v121 = vld [vmem:[#allocation7] sm:$0xf]
    %v122 = vld [vmem:[#allocation7 + $0x4] sm:$0xf]
    %v123 = vld [vmem:[#allocation7 + $0x8] sm:$0xf]
    %v124 = vld [vmem:[#allocation7 + $0xc] sm:$0xf]
    %v125 = vld [vmem:[#allocation7 + $0x10] sm:$0xf]
    %v126 = vld [vmem:[#allocation7 + $0x14] sm:$0xf]
    %v127 = vld [vmem:[#allocation7 + $0x18] sm:$0xf]
    %v128 = vld [vmem:[#allocation7 + $0x1c] sm:$0xf]
    %v129 = vld [vmem:[#allocation7 + $0x20] sm:$0xf]
    %v130 = vld [vmem:[#allocation7 + $0x24] sm:$0xf]
    %v131 = vld [vmem:[#allocation7 + $0x28] sm:$0xf]
    %v132 = vld [vmem:[#allocation7 + $0x2c] sm:$0xf]
    %v133 = vld [vmem:[#allocation7 + $0x30] sm:$0xf]
    %v134 = vld [vmem:[#allocation7 + $0x34] sm:$0xf]
    %v135 = vld [vmem:[#allocation7 + $0x38] sm:$0xf]
    %v136 = vld [vmem:[#allocation7 + $0x3c] sm:$0xf]
    %v137 = vld [vmem:[%s4] sm:$0x1]
    %v139 = vlaneseq
    %v140 = vshrl.u32 %v139, 7
    %v141 = vsub.s32 0, %v140
    %v142 = vrot.slane %v137, %v141
    %v160 = vunpack.c.l.b16 %v121
    %v161 = vunpack.c.l.b16 %v122
    %v162 = vunpack.c.l.b16 %v123
    %v163 = vunpack.c.l.b16 %v124
    %v164 = vunpack.c.l.b16 %v125
    %v165 = vunpack.c.l.b16 %v126
    %v166 = vunpack.c.l.b16 %v127
    %v167 = vunpack.c.l.b16 %v128
    %v168 = vunpack.c.l.b16 %v129
    %v169 = vunpack.c.l.b16 %v130
    %v170 = vunpack.c.l.b16 %v131
    %v171 = vunpack.c.l.b16 %v132
    %v172 = vunpack.c.l.b16 %v133
    %v173 = vunpack.c.l.b16 %v134
    %v174 = vunpack.c.l.b16 %v135
    %v175 = vunpack.c.l.b16 %v136
    %v176 = vpack.c.b16 %v161, %v160
    %v177 = vpack.c.b16 %v163, %v162
    %v178 = vpack.c.b16 %v165, %v164
    %v179 = vpack.c.b16 %v167, %v166
    %v180 = vpack.c.b16 %v169, %v168
    %v181 = vpack.c.b16 %v171, %v170
    %v182 = vpack.c.b16 %v173, %v172
    %v183 = vpack.c.b16 %v175, %v174
    %192 = vmatprep.subr.bf16.mxu0 0
    %193 = vmatpush1.bf16.msra.mxu0 %v183
    %194 = vmatprep.subr.bf16.mxu0 0
    %195 = vmatpush1.bf16.msra.mxu0 %v182
    %196 = vmatprep.subr.bf16.mxu0 0
    %197 = vmatpush1.bf16.msra.mxu0 %v181
    %198 = vmatprep.subr.bf16.mxu0 0
    %199 = vmatpush1.bf16.msra.mxu0 %v180
    %200 = vmatprep.subr.bf16.mxu0 0
    %201 = vmatpush1.bf16.msra.mxu0 %v179
    %202 = vmatprep.subr.bf16.mxu0 0
    %203 = vmatpush1.bf16.msra.mxu0 %v178
    %204 = vmatprep.subr.bf16.mxu0 0
    %205 = vmatpush1.bf16.msra.mxu0 %v177
    %206 = vmatprep.subr.bf16.mxu0 0
    %207 = vmatpush1.bf16.msra.mxu0 %v176
    %208 = vmatprep.subr.bf16.mxu0 0
    %209 = vmatpush2.bf16.msra.mxu0 0
    %210 = vmatprep.subr.bf16.mxu0 0
    %211 = vmatpush2.bf16.msra.mxu0 0
    %212 = vmatprep.subr.bf16.mxu0 0
    %213 = vmatpush2.bf16.msra.mxu0 0
    %214 = vmatprep.subr.bf16.mxu0 0
    %215 = vmatpush2.bf16.msra.mxu0 0
    %216 = vmatprep.subr.bf16.mxu0 0
    %217 = vmatpush2.bf16.msra.mxu0 0
    %218 = vmatprep.subr.bf16.mxu0 0
    %219 = vmatpush2.bf16.msra.mxu0 0
    %220 = vmatprep.subr.bf16.mxu0 0
    %221 = vmatpush2.bf16.msra.mxu0 0
    %222 = vmatprep.subr.bf16.mxu0 0
    %223 = vmatpush2.bf16.msra.mxu0 0
    %224 = vmatprep.mubr.bf16.mxu0 0
    %225 = vmatmul.mubr.bf16.gmra.mxu0 %v120
    %v226 = vpop.f32.mrf.mxu0
    %v227 = vadd.f32 %v142, %v226
    %v228 = vpop.f32.mrf.mxu0
    %v229 = vpop.f32.mrf.mxu0
    %v230 = vpop.f32.mrf.mxu0
    %231 = vdwg.mxu0
    %v232 = vmax.f32 %v227, 0.0
    %v233 = vpack.c.bf16 %v232, %v232
    %v234 = vld [vmem:[#allocation8] sm:$0xf]
    %v235 = vld [vmem:[#allocation8 + $0x4] sm:$0xf]
    %v236 = vld [vmem:[#allocation8 + $0x8] sm:$0xf]
    %v237 = vld [vmem:[#allocation8 + $0xc] sm:$0xf]
    %v238 = vld [vmem:[#allocation8 + $0x10] sm:$0xf]
    %v239 = vld [vmem:[#allocation8 + $0x14] sm:$0xf]
    %v240 = vld [vmem:[#allocation8 + $0x18] sm:$0xf]
    %v241 = vld [vmem:[#allocation8 + $0x1c] sm:$0xf]
    %v242 = vld [vmem:[#allocation8 + $0x20] sm:$0xf]
    %v243 = vld [vmem:[#allocation8 + $0x24] sm:$0xf]
    %v244 = vld [vmem:[#allocation8 + $0x28] sm:$0xf]
    %v245 = vld [vmem:[#allocation8 + $0x2c] sm:$0xf]
    %v246 = vld [vmem:[#allocation8 + $0x30] sm:$0xf]
    %v247 = vld [vmem:[#allocation8 + $0x34] sm:$0xf]
    %v248 = vld [vmem:[#allocation8 + $0x38] sm:$0xf]
    %v249 = vld [vmem:[#allocation8 + $0x3c] sm:$0xf]
    %v250 = vld [vmem:[%s6] sm:$0x1]
    %v252 = vlaneseq
    %v253 = vshrl.u32 %v252, 7
    %v254 = vsub.s32 0, %v253
    %v255 = vrot.slane %v250, %v254
    %v273 = vunpack.c.l.b16 %v234
    %v274 = vunpack.c.l.b16 %v235
    %v275 = vunpack.c.l.b16 %v236
    %v276 = vunpack.c.l.b16 %v237
    %v277 = vunpack.c.l.b16 %v238
    %v278 = vunpack.c.l.b16 %v239
    %v279 = vunpack.c.l.b16 %v240
    %v280 = vunpack.c.l.b16 %v241
    %v281 = vunpack.c.l.b16 %v242
    %v282 = vunpack.c.l.b16 %v243
    %v283 = vunpack.c.l.b16 %v244
    %v284 = vunpack.c.l.b16 %v245
    %v285 = vunpack.c.l.b16 %v246
    %v286 = vunpack.c.l.b16 %v247
    %v287 = vunpack.c.l.b16 %v248
    %v288 = vunpack.c.l.b16 %v249
    %v289 = vpack.c.b16 %v274, %v273
    %v290 = vpack.c.b16 %v276, %v275
    %v291 = vpack.c.b16 %v278, %v277
    %v292 = vpack.c.b16 %v280, %v279
    %v293 = vpack.c.b16 %v282, %v281
    %v294 = vpack.c.b16 %v284, %v283
    %v295 = vpack.c.b16 %v286, %v285
    %v296 = vpack.c.b16 %v288, %v287
    %305 = vmatprep.subr.bf16.mxu0 0
    %306 = vmatpush1.bf16.msra.mxu0 %v296
    %307 = vmatprep.subr.bf16.mxu0 0
    %308 = vmatpush1.bf16.msra.mxu0 %v295
    %309 = vmatprep.subr.bf16.mxu0 0
    %310 = vmatpush1.bf16.msra.mxu0 %v294
    %311 = vmatprep.subr.bf16.mxu0 0
    %312 = vmatpush1.bf16.msra.mxu0 %v293
    %313 = vmatprep.subr.bf16.mxu0 0
    %314 = vmatpush1.bf16.msra.mxu0 %v292
    %315 = vmatprep.subr.bf16.mxu0 0
    %316 = vmatpush1.bf16.msra.mxu0 %v291
    %317 = vmatprep.subr.bf16.mxu0 0
    %318 = vmatpush1.bf16.msra.mxu0 %v290
    %319 = vmatprep.subr.bf16.mxu0 0
    %320 = vmatpush1.bf16.msra.mxu0 %v289
    %321 = vmatprep.subr.bf16.mxu0 0
    %322 = vmatpush2.bf16.msra.mxu0 0
    %323 = vmatprep.subr.bf16.mxu0 0
    %324 = vmatpush2.bf16.msra.mxu0 0
    %325 = vmatprep.subr.bf16.mxu0 0
    %326 = vmatpush2.bf16.msra.mxu0 0
    %327 = vmatprep.subr.bf16.mxu0 0
    %328 = vmatpush2.bf16.msra.mxu0 0
    %329 = vmatprep.subr.bf16.mxu0 0
    %330 = vmatpush2.bf16.msra.mxu0 0
    %331 = vmatprep.subr.bf16.mxu0 0
    %332 = vmatpush2.bf16.msra.mxu0 0
    %333 = vmatprep.subr.bf16.mxu0 0
    %334 = vmatpush2.bf16.msra.mxu0 0
    %335 = vmatprep.subr.bf16.mxu0 0
    %336 = vmatpush2.bf16.msra.mxu0 0
    %337 = vmatprep.mubr.bf16.mxu0 0
    %338 = vmatmul.mubr.bf16.gmra.mxu0 %v233
    %v339 = vpop.f32.mrf.mxu0
    %v340 = vadd.f32 %v255, %v339
    %v341 = vpop.f32.mrf.mxu0
    %v342 = vpop.f32.mrf.mxu0
    %v343 = vpop.f32.mrf.mxu0
    %344 = vdwg.mxu0
    %345 = vmax.xlane.f32.xlu0 %v340
    %v346 = vpop.xlane.xlu0 %345
    %v347 = vsub.f32 %v340, %v346
    %v348 = vmul.f32 %v347, 1.442695
    %v349 = vpow.pop %v348
    %350 = vadd.xlane.f32.xlu0 %v349
    %v351 = vpop.xlane.xlu0 %350
    %v352 = vrcp.pop %v351
    %v353 = vmul.f32 %v349, %v352
    %vm354 = vcmask 64512
    %355 = vst.msk [vmem:[#allocation10] sm:$0xff] %vm354, %v353
    // Predicated region
    $region46: #{tpu_custom_call.1} parent=1 // pred_check
      _
    $region47: #{tpu_custom_call.1} parent=1 // pred_check_branch
      %357 = sbr.rel (0) target = $region49
    $region48: #{tpu_custom_call.1} parent=1 // pred_region
      %s359 = ssub.s32 128, 128
      %360 = vsyncadd [#allocation4], %s359
      %s362 = sshll.u32 [#allocation10], 4
      %s363 = int_to_ptr.vmem [resolvable:$true] %s362
      %365 = dma.vmem_to_hbm [thread:$0]  %s363, 128, %s7, [#allocation4]
    $region49: #{tpu_custom_call.1} parent=1 // pred_fallthru
      _
    // Predicated region
    $region50: #{tpu_custom_call.1} parent=1 // pred_check
      _
    $region51: #{tpu_custom_call.1} parent=1 // pred_check_branch
      %367 = sbr.rel (0) target = $region53
    $region52: #{tpu_custom_call.1} parent=1 // pred_region
      %368 = dma.done [#allocation4], 128
    $region53: #{tpu_custom_call.1} parent=1 // pred_fallthru
      _
    %369 = vsyncpa [#allocation3], 1
    %370 = vsyncpa [#allocation6], 1
    %371 = vsyncpa [#allocation9], 1
    %372 = vsyncpa [#allocation4], 1

</llo_original>
